<compile_context>
chip_gen: v7x
topology: tpu7x:2x2x1
jax: 0.10.0
libtpu: 0.0.40
codegen_flags: <defaults>
</compile_context>

<pallas_src>
import functools

import jax
import jax.numpy as jnp
from jax import lax
from jax.experimental import pallas as pl
from jax.experimental.pallas import tpu as pltpu


def _make_loss_kernel(C, V, TR, TR_ACC, Jp):
    """Builds the per-block kernel.

    w_ref : (C,)                  f32 SMEM  class weights
    x_ref : (1, C, TR, 128)       f32 VMEM  logits block (class, rows, lanes)
    t_ref : (1, TR, 128)          i32 VMEM  target block
    o_ref : (1, 1, 5, TR_ACC, 128) f32 VMEM per-(batch, split) partial sums,
            resident across the inner grid axis:
            [0]=inter [1]=sum fg probs [2]=sum fg one-hot [3]=ce num [4]=ce den
    """

    def kernel(w_ref, x_ref, t_ref, o_ref):
        p_id = pl.program_id(1)
        j_id = pl.program_id(2)

        @pl.when(j_id == 0)
        def _init():
            o_ref[...] = jnp.zeros_like(o_ref)

        x = x_ref[0].astype(jnp.float32)          # (C, TR, 128)
        t = t_ref[0]                              # (TR, 128) int32

        # Voxel-position mask: handles the ragged tail block, lane padding
        # (H*W*S % 128 != 0) and clamped overshoot blocks of the 2-way split.
        blk = p_id * Jp + j_id                    # nominal (unclamped) block idx
        row = lax.broadcasted_iota(jnp.int32, (TR, 128), 0)
        lane = lax.broadcasted_iota(jnp.int32, (TR, 128), 1)
        pos = (blk * TR + row) * 128 + lane
        valid = pos < V

        # Numerically stable softmax pieces over the (short) class axis.
        m = jnp.max(x, axis=0)                    # (TR, 128)
        e = jnp.exp(x - m[None])                  # (C, TR, 128)
        s_fg = jnp.sum(e[1:], axis=0)             # foreground exp sum
        s_all = s_fg + e[0]
        inv_s = pl.reciprocal(s_all, approx=False)
        lse = m + jnp.log(s_all)

        # Gather logit / exp / weight at the target class (C is tiny & static).
        zeros = jnp.zeros((TR, 128), jnp.float32)
        x_t, e_t, w_t = zeros, zeros, zeros
        for c in range(C):
            is_c = t == c
            x_t = jnp.where(is_c, x[c], x_t)
            e_t = jnp.where(is_c, e[c], e_t)
            w_t = jnp.where(is_c, w_ref[c], w_t)

        nll = lse - x_t                           # -log softmax[target]
        fg = valid & (t >= 1)
        f32 = jnp.float32

        inter_v = jnp.where(fg, e_t * inv_s, f32(0.0))
        probfg_v = jnp.where(valid, s_fg * inv_s, f32(0.0))
        tgtfg_v = jnp.where(fg, f32(1.0), f32(0.0))
        cenum_v = jnp.where(valid, w_t * nll, f32(0.0))
        ceden_v = jnp.where(valid, w_t, f32(0.0))

        if TR_ACC == TR:
            rsum = lambda v: v                    # tiny-input path (TR < 8 rows)
        else:
            # (TR,128) -> (TR/8, 8, 128) is the native vreg tiling, so this is
            # a pure VPU vreg-add reduction (no cross-lane work per step).
            rsum = lambda v: jnp.sum(v.reshape(TR // 8, 8, 128), axis=0)

        o_ref[0, 0, 0] += rsum(inter_v)
        o_ref[0, 0, 1] += rsum(probfg_v)
        o_ref[0, 0, 2] += rsum(tgtfg_v)
        o_ref[0, 0, 3] += rsum(cenum_v)
        o_ref[0, 0, 4] += rsum(ceden_v)

    return kernel


def _round_up(a, b):
    return ((a + b - 1) // b) * b


@functools.partial(jax.jit, static_argnames=("alpha", "block_rows"))
def dice_ce_loss(logits, target, weight, alpha=0.5, block_rows=None):
    """logits: (B,C,H,W,S) float, target: (B,H,W,S) int, weight: (C,) float."""
    B, C, H, W, S = logits.shape
    V = H * W * S

    x = logits.reshape(B, C, V)                   # free reshape, no transpose
    t = target.reshape(B, V).astype(jnp.int32)

    Vp = _round_up(V, 128)
    if Vp != V:
        # Only taken when H*W*S is not lane aligned (one small copy).
        x = jnp.pad(x, ((0, 0), (0, 0), (0, Vp - V)))
        t = jnp.pad(t, ((0, 0), (0, Vp - V)))
    Vr = Vp // 128
    x = x.reshape(B, C, Vr, 128)                  # voxels -> (rows, lanes)
    t = t.reshape(B, Vr, 128)

    # Rows per block: ~4 MiB of logits per step (double-buffered ~10 MiB,
    # v7x-safe), multiple of 8.
    if block_rows is None:
        tr_max = max(8, ((4 * 1024 * 1024) // (C * 128 * 4)) // 8 * 8)
    else:
        tr_max = block_rows
    TR = Vr if Vr <= tr_max else tr_max
    num_j = pl.cdiv(Vr, TR)
    P = 2 if num_j >= 2 else 1                    # feed both v7x TensorCores
    Jp = pl.cdiv(num_j, P)
    TR_ACC = 8 if TR % 8 == 0 else TR
    last_blk = num_j - 1

    w = weight.astype(jnp.float32)
    kernel = _make_loss_kernel(C=C, V=V, TR=TR, TR_ACC=TR_ACC, Jp=Jp)

    def x_map(b, p, j):
        return (b, 0, jnp.minimum(p * Jp + j, last_blk), 0)

    def t_map(b, p, j):
        return (b, jnp.minimum(p * Jp + j, last_blk), 0)

    def o_map(b, p, j):
        return (b, p, 0, 0, 0)

    partials = pl.pallas_call(
        kernel,
        out_shape=jax.ShapeDtypeStruct((B, P, 5, TR_ACC, 128), jnp.float32),
        grid=(B, P, Jp),
        in_specs=[
            pl.BlockSpec(memory_space=pltpu.MemorySpace.SMEM),   # class weights
            pl.BlockSpec((1, C, TR, 128), x_map),                # logits block
            pl.BlockSpec((1, TR, 128), t_map),                   # target block
        ],
        out_specs=pl.BlockSpec((1, 1, 5, TR_ACC, 128), o_map),
        compiler_params=pltpu.CompilerParams(
            dimension_semantics=("parallel", "parallel", "arbitrary")),
    )(w, x, t)

    sums = jnp.sum(partials, axis=(0, 1, 3, 4))   # (5,) final reduce in JAX
    inter, probs_fg, tgt_fg, ce_num, ce_den = (
        sums[0], sums[1], sums[2], sums[3], sums[4])

    smooth = jnp.float32(0.01)
    dice = 2.0 * inter / (probs_fg + tgt_fg + smooth)
    ce = ce_num / ce_den                          # F.cross_entropy weighted mean
    return (1.0 - alpha) * ce + (1.0 - dice) * alpha


def dice_ce_loss_ref(logits, target, weight, alpha=0.5):
    """Pure-JAX reference mirroring the PyTorch forward exactly."""
    smooth = 0.01
    B, C = logits.shape[0], logits.shape[1]
    probs = jax.nn.softmax(logits, axis=1)
    onehot = jax.nn.one_hot(target, C, dtype=jnp.float32)        # (B,H,W,S,C)
    p1 = probs.reshape(B, C, -1)[:, 1:, :]
    t1 = jnp.moveaxis(onehot, -1, 1).reshape(B, C, -1)[:, 1:, :]
    inter = jnp.sum(p1 * t1)
    union = jnp.sum(p1) + jnp.sum(t1) + smooth
    dice = 2.0 * inter / union
    lse = jax.scipy.special.logsumexp(logits, axis=1)            # (B,H,W,S)
    logit_t = jnp.take_along_axis(logits, target[:, None], axis=1)[:, 0]
    w_t = weight[target]
    ce = jnp.sum(w_t * (lse - logit_t)) / jnp.sum(w_t)
    return (1.0 - alpha) * ce + (1.0 - dice) * alpha


if __name__ == "__main__":
    key = jax.random.PRNGKey(0)

    def run_case(B, C, H, W, S, alpha=0.5, block_rows=None, salt=0):
        k1, k2, k3 = jax.random.split(jax.random.fold_in(key, salt), 3)
        logits = jax.random.normal(k1, (B, C, H, W, S), dtype=jnp.float32)
        target = jax.random.randint(k2, (B, H, W, S), 0, C, dtype=jnp.int32)
        weight = jax.random.uniform(k3, (C,), dtype=jnp.float32,
                                    minval=0.5, maxval=1.5)
        out = dice_ce_loss(logits, target, weight, alpha=alpha,
                           block_rows=block_rows)
        out = jax.block_until_ready(out)
        ref = dice_ce_loss_ref(logits, target, weight, alpha=alpha)
        assert jnp.allclose(out, ref, rtol=1e-5, atol=1e-5), (out, ref)

    # multi-block accumulation + 2-way core split + (8,128) row partials
    run_case(2, 4, 16, 16, 16, block_rows=8, salt=0)
    # auto block size (single big block per batch)
    run_case(2, 4, 16, 16, 16, salt=1)
    # odd block count -> clamped overshoot block on the 2-way split
    run_case(1, 4, 16, 16, 20, block_rows=8, salt=2)
    # voxel count not a multiple of 128 -> lane-pad + in-kernel mask path
    run_case(1, 4, 9, 9, 9, salt=3)

    print("KERNEL_OK")
</pallas_src>

<mosaic_0001>
module attributes {stable_mosaic.version = 11 : i64} {
  func.func @kernel(%arg0: i32, %arg1: i32, %arg2: i32, %arg3: memref<4xf32, #tpu.memory_space<smem>>, %arg4: memref<1x4x8x128xf32, #tpu.memory_space<vmem>>, %arg5: memref<1x8x128xi32, #tpu.memory_space<vmem>>, %arg6: memref<1x1x5x8x128xf32, #tpu.memory_space<vmem>>) attributes {dimension_semantics = [#tpu.dimension_semantics<parallel>, #tpu.dimension_semantics<parallel>, #tpu.dimension_semantics<arbitrary>], iteration_bounds = array<i64: 2, 2, 2>, scalar_prefetch = 0 : i64, scratch_operands = 0 : i64, tpu.core_type = #tpu.core_type<tc>, window_params = [{transform_indices = @transform_0, window_bounds = array<i64: 4>}, {transform_indices = @transform_1, window_bounds = array<i64: 1, 4, 8, 128>}, {transform_indices = @transform_2, window_bounds = array<i64: 1, 8, 128>}, {transform_indices = @transform_3, window_bounds = array<i64: 1, 1, 5, 8, 128>}]} {
    %c0_i32 = arith.constant 0 : i32
    %0 = arith.cmpi eq, %arg2, %c0_i32 : i32
    %1 = arith.extui %0 : i1 to i32
    %c0_i32_0 = arith.constant 0 : i32
    %2 = arith.cmpi ne, %1, %c0_i32_0 : i32
    scf.if %2 {
      %cst_68 = arith.constant 0.000000e+00 : f32
      %125 = vector.broadcast %cst_68 : f32 to vector<1x1x5x8x128xf32>
      %c0_69 = arith.constant 0 : index
      %c0_70 = arith.constant 0 : index
      %c0_71 = arith.constant 0 : index
      %c0_72 = arith.constant 0 : index
      %c0_73 = arith.constant 0 : index
      %126 = vector.load %arg6[%c0_69, %c0_70, %c0_71, %c0_72, %c0_73] : memref<1x1x5x8x128xf32, #tpu.memory_space<vmem>>, vector<1x1x5x8x128xf32>
      tpu.vector_store %arg6[%c0_69, %c0_70, %c0_71, %c0_72, %c0_73], %125 {strides = array<i32>} : memref<1x1x5x8x128xf32, #tpu.memory_space<vmem>>, vector<1x1x5x8x128xf32>,
    } else {
    }
    %c0 = arith.constant 0 : index
    %c0_1 = arith.constant 0 : index
    %c0_2 = arith.constant 0 : index
    %c0_3 = arith.constant 0 : index
    %3 = vector.load %arg4[%c0, %c0_1, %c0_2, %c0_3] : memref<1x4x8x128xf32, #tpu.memory_space<vmem>>, vector<1x4x8x128xf32>
    %4 = vector.shape_cast %3 : vector<1x4x8x128xf32> to vector<4x8x128xf32>
    %c0_4 = arith.constant 0 : index
    %c0_5 = arith.constant 0 : index
    %c0_6 = arith.constant 0 : index
    %5 = vector.load %arg5[%c0_4, %c0_5, %c0_6] : memref<1x8x128xi32, #tpu.memory_space<vmem>>, vector<1x8x128xi32>
    %6 = vector.shape_cast %5 : vector<1x8x128xi32> to vector<8x128xi32>
    %c2_i32 = arith.constant 2 : i32
    %7 = arith.muli %arg1, %c2_i32 : i32
    %8 = arith.addi %7, %arg2 : i32
    %9 = tpu.iota {dimensions = array<i32: 0>} : vector<8x128xi32>
    %10 = tpu.iota {dimensions = array<i32: 1>} : vector<8x128xi32>
    %c8_i32 = arith.constant 8 : i32
    %11 = arith.muli %8, %c8_i32 : i32
    %12 = vector.broadcast %11 : i32 to vector<8x128xi32>
    %13 = arith.addi %12, %9 : vector<8x128xi32>
    %c128_i32 = arith.constant 128 : i32
    %14 = vector.broadcast %c128_i32 : i32 to vector<8x128xi32>
    %15 = arith.muli %13, %14 : vector<8x128xi32>
    %16 = arith.addi %15, %10 : vector<8x128xi32>
    %c4096_i32 = arith.constant 4096 : i32
    %17 = vector.broadcast %c4096_i32 : i32 to vector<8x128xi32>
    %18 = arith.cmpi slt, %16, %17 : vector<8x128xi32>
    %cst = arith.constant dense<0xFF800000> : vector<8x128xf32>
    %19 = vector.multi_reduction <maximumf>, %4, %cst [0] : vector<4x8x128xf32> to vector<8x128xf32>
    %20 = vector.shape_cast %19 : vector<8x128xf32> to vector<1x8x128xf32>
    %21 = vector.broadcast %20 : vector<1x8x128xf32> to vector<4x8x128xf32>
    %22 = arith.subf %4, %21 : vector<4x8x128xf32>
    %23 = math.exp %22 : vector<4x8x128xf32>
    %24 = vector.extract_strided_slice %23 {offsets = [1, 0, 0], sizes = [3, 8, 128], strides = [1, 1, 1]} : vector<4x8x128xf32> to vector<3x8x128xf32>
    %cst_7 = arith.constant dense<0.000000e+00> : vector<8x128xf32>
    %25 = vector.multi_reduction <add>, %24, %cst_7 [0] : vector<3x8x128xf32> to vector<8x128xf32>
    %26 = vector.extract_strided_slice %23 {offsets = [0, 0, 0], sizes = [1, 8, 128], strides = [1, 1, 1]} : vector<4x8x128xf32> to vector<1x8x128xf32>
    %27 = vector.shape_cast %26 : vector<1x8x128xf32> to vector<8x128xf32>
    %28 = arith.addf %25, %27 : vector<8x128xf32>
    %29 = tpu.reciprocal %28 : vector<8x128xf32> -> vector<8x128xf32>
    %30 = math.log %28 : vector<8x128xf32>
    %31 = arith.addf %19, %30 : vector<8x128xf32>
    %cst_8 = arith.constant 0.000000e+00 : f32
    %32 = vector.broadcast %cst_8 : f32 to vector<8x128xf32>
    %c0_i32_9 = arith.constant 0 : i32
    %33 = vector.broadcast %c0_i32_9 : i32 to vector<8x128xi32>
    %34 = arith.cmpi eq, %6, %33 : vector<8x128xi32>
    %35 = vector.extract_strided_slice %4 {offsets = [0, 0, 0], sizes = [1, 8, 128], strides = [1, 1, 1]} : vector<4x8x128xf32> to vector<1x8x128xf32>
    %36 = vector.shape_cast %35 : vector<1x8x128xf32> to vector<8x128xf32>
    %37 = arith.select %34, %36, %32 : vector<8x128xi1>, vector<8x128xf32>
    %38 = vector.extract_strided_slice %23 {offsets = [0, 0, 0], sizes = [1, 8, 128], strides = [1, 1, 1]} : vector<4x8x128xf32> to vector<1x8x128xf32>
    %39 = vector.shape_cast %38 : vector<1x8x128xf32> to vector<8x128xf32>
    %40 = arith.select %34, %39, %32 : vector<8x128xi1>, vector<8x128xf32>
    %c0_10 = arith.constant 0 : index
    %41 = memref.load %arg3[%c0_10] : memref<4xf32, #tpu.memory_space<smem>>
    %42 = vector.broadcast %41 : f32 to vector<8x128xf32>
    %43 = arith.select %34, %42, %32 : vector<8x128xi1>, vector<8x128xf32>
    %c1_i32 = arith.constant 1 : i32
    %44 = vector.broadcast %c1_i32 : i32 to vector<8x128xi32>
    %45 = arith.cmpi eq, %6, %44 : vector<8x128xi32>
    %46 = vector.extract_strided_slice %4 {offsets = [1, 0, 0], sizes = [1, 8, 128], strides = [1, 1, 1]} : vector<4x8x128xf32> to vector<1x8x128xf32>
    %47 = vector.shape_cast %46 : vector<1x8x128xf32> to vector<8x128xf32>
    %48 = arith.select %45, %47, %37 : vector<8x128xi1>, vector<8x128xf32>
    %49 = vector.extract_strided_slice %23 {offsets = [1, 0, 0], sizes = [1, 8, 128], strides = [1, 1, 1]} : vector<4x8x128xf32> to vector<1x8x128xf32>
    %50 = vector.shape_cast %49 : vector<1x8x128xf32> to vector<8x128xf32>
    %51 = arith.select %45, %50, %40 : vector<8x128xi1>, vector<8x128xf32>
    %c1 = arith.constant 1 : index
    %52 = memref.load %arg3[%c1] : memref<4xf32, #tpu.memory_space<smem>>
    %53 = vector.broadcast %52 : f32 to vector<8x128xf32>
    %54 = arith.select %45, %53, %43 : vector<8x128xi1>, vector<8x128xf32>
    %c2_i32_11 = arith.constant 2 : i32
    %55 = vector.broadcast %c2_i32_11 : i32 to vector<8x128xi32>
    %56 = arith.cmpi eq, %6, %55 : vector<8x128xi32>
    %57 = vector.extract_strided_slice %4 {offsets = [2, 0, 0], sizes = [1, 8, 128], strides = [1, 1, 1]} : vector<4x8x128xf32> to vector<1x8x128xf32>
    %58 = vector.shape_cast %57 : vector<1x8x128xf32> to vector<8x128xf32>
    %59 = arith.select %56, %58, %48 : vector<8x128xi1>, vector<8x128xf32>
    %60 = vector.extract_strided_slice %23 {offsets = [2, 0, 0], sizes = [1, 8, 128], strides = [1, 1, 1]} : vector<4x8x128xf32> to vector<1x8x128xf32>
    %61 = vector.shape_cast %60 : vector<1x8x128xf32> to vector<8x128xf32>
    %62 = arith.select %56, %61, %51 : vector<8x128xi1>, vector<8x128xf32>
    %c2 = arith.constant 2 : index
    %63 = memref.load %arg3[%c2] : memref<4xf32, #tpu.memory_space<smem>>
    %64 = vector.broadcast %63 : f32 to vector<8x128xf32>
    %65 = arith.select %56, %64, %54 : vector<8x128xi1>, vector<8x128xf32>
    %c3_i32 = arith.constant 3 : i32
    %66 = vector.broadcast %c3_i32 : i32 to vector<8x128xi32>
    %67 = arith.cmpi eq, %6, %66 : vector<8x128xi32>
    %68 = vector.extract_strided_slice %4 {offsets = [3, 0, 0], sizes = [1, 8, 128], strides = [1, 1, 1]} : vector<4x8x128xf32> to vector<1x8x128xf32>
    %69 = vector.shape_cast %68 : vector<1x8x128xf32> to vector<8x128xf32>
    %70 = arith.select %67, %69, %59 : vector<8x128xi1>, vector<8x128xf32>
    %71 = vector.extract_strided_slice %23 {offsets = [3, 0, 0], sizes = [1, 8, 128], strides = [1, 1, 1]} : vector<4x8x128xf32> to vector<1x8x128xf32>
    %72 = vector.shape_cast %71 : vector<1x8x128xf32> to vector<8x128xf32>
    %73 = arith.select %67, %72, %62 : vector<8x128xi1>, vector<8x128xf32>
    %c3 = arith.constant 3 : index
    %74 = memref.load %arg3[%c3] : memref<4xf32, #tpu.memory_space<smem>>
    %75 = vector.broadcast %74 : f32 to vector<8x128xf32>
    %76 = arith.select %67, %75, %65 : vector<8x128xi1>, vector<8x128xf32>
    %77 = arith.subf %31, %70 : vector<8x128xf32>
    %c1_i32_12 = arith.constant 1 : i32
    %78 = vector.broadcast %c1_i32_12 : i32 to vector<8x128xi32>
    %79 = arith.cmpi sge, %6, %78 : vector<8x128xi32>
    %80 = arith.andi %18, %79 : vector<8x128xi1>
    %81 = arith.mulf %73, %29 : vector<8x128xf32>
    %cst_13 = arith.constant 0.000000e+00 : f32
    %82 = vector.broadcast %cst_13 : f32 to vector<8x128xf32>
    %83 = arith.select %80, %81, %82 : vector<8x128xi1>, vector<8x128xf32>
    %84 = arith.mulf %25, %29 : vector<8x128xf32>
    %cst_14 = arith.constant 0.000000e+00 : f32
    %85 = vector.broadcast %cst_14 : f32 to vector<8x128xf32>
    %86 = arith.select %18, %84, %85 : vector<8x128xi1>, vector<8x128xf32>
    %cst_15 = arith.constant 1.000000e+00 : f32
    %cst_16 = arith.constant 0.000000e+00 : f32
    %87 = vector.broadcast %cst_15 : f32 to vector<8x128xf32>
    %88 = vector.broadcast %cst_16 : f32 to vector<8x128xf32>
    %89 = arith.select %80, %87, %88 : vector<8x128xi1>, vector<8x128xf32>
    %90 = arith.mulf %76, %77 : vector<8x128xf32>
    %cst_17 = arith.constant 0.000000e+00 : f32
    %91 = vector.broadcast %cst_17 : f32 to vector<8x128xf32>
    %92 = arith.select %18, %90, %91 : vector<8x128xi1>, vector<8x128xf32>
    %cst_18 = arith.constant 0.000000e+00 : f32
    %93 = vector.broadcast %cst_18 : f32 to vector<8x128xf32>
    %94 = arith.select %18, %76, %93 : vector<8x128xi1>, vector<8x128xf32>
    %c0_19 = arith.constant 0 : index
    %c0_20 = arith.constant 0 : index
    %c0_21 = arith.constant 0 : index
    %c0_22 = arith.constant 0 : index
    %c0_23 = arith.constant 0 : index
    %95 = vector.load %arg6[%c0_19, %c0_20, %c0_21, %c0_22, %c0_23] : memref<1x1x5x8x128xf32, #tpu.memory_space<vmem>>, vector<1x1x1x8x128xf32>
    %96 = vector.shape_cast %95 : vector<1x1x1x8x128xf32> to vector<8x128xf32>
    %97 = arith.addf %96, %83 : vector<8x128xf32>
    %c0_24 = arith.constant 0 : index
    %c0_25 = arith.constant 0 : index
    %c0_26 = arith.constant 0 : index
    %c0_27 = arith.constant 0 : index
    %c0_28 = arith.constant 0 : index
    %98 = vector.load %arg6[%c0_24, %c0_25, %c0_26, %c0_27, %c0_28] : memref<1x1x5x8x128xf32, #tpu.memory_space<vmem>>, vector<1x1x1x8x128xf32>
    %99 = vector.shape_cast %98 : vector<1x1x1x8x128xf32> to vector<8x128xf32>
    %100 = vector.shape_cast %97 : vector<8x128xf32> to vector<1x1x1x8x128xf32>
    tpu.vector_store %arg6[%c0_24, %c0_25, %c0_26, %c0_27, %c0_28], %100 {strides = array<i32>} : memref<1x1x5x8x128xf32, #tpu.memory_space<vmem>>, vector<1x1x1x8x128xf32>,
    %c0_29 = arith.constant 0 : index
    %c0_30 = arith.constant 0 : index
    %c1_31 = arith.constant 1 : index
    %c0_32 = arith.constant 0 : index
    %c0_33 = arith.constant 0 : index
    %101 = vector.load %arg6[%c0_29, %c0_30, %c1_31, %c0_32, %c0_33] : memref<1x1x5x8x128xf32, #tpu.memory_space<vmem>>, vector<1x1x1x8x128xf32>
    %102 = vector.shape_cast %101 : vector<1x1x1x8x128xf32> to vector<8x128xf32>
    %103 = arith.addf %102, %86 : vector<8x128xf32>
    %c0_34 = arith.constant 0 : index
    %c0_35 = arith.constant 0 : index
    %c1_36 = arith.constant 1 : index
    %c0_37 = arith.constant 0 : index
    %c0_38 = arith.constant 0 : index
    %104 = vector.load %arg6[%c0_34, %c0_35, %c1_36, %c0_37, %c0_38] : memref<1x1x5x8x128xf32, #tpu.memory_space<vmem>>, vector<1x1x1x8x128xf32>
    %105 = vector.shape_cast %104 : vector<1x1x1x8x128xf32> to vector<8x128xf32>
    %106 = vector.shape_cast %103 : vector<8x128xf32> to vector<1x1x1x8x128xf32>
    tpu.vector_store %arg6[%c0_34, %c0_35, %c1_36, %c0_37, %c0_38], %106 {strides = array<i32>} : memref<1x1x5x8x128xf32, #tpu.memory_space<vmem>>, vector<1x1x1x8x128xf32>,
    %c0_39 = arith.constant 0 : index
    %c0_40 = arith.constant 0 : index
    %c2_41 = arith.constant 2 : index
    %c0_42 = arith.constant 0 : index
    %c0_43 = arith.constant 0 : index
    %107 = vector.load %arg6[%c0_39, %c0_40, %c2_41, %c0_42, %c0_43] : memref<1x1x5x8x128xf32, #tpu.memory_space<vmem>>, vector<1x1x1x8x128xf32>
    %108 = vector.shape_cast %107 : vector<1x1x1x8x128xf32> to vector<8x128xf32>
    %109 = arith.addf %108, %89 : vector<8x128xf32>
    %c0_44 = arith.constant 0 : index
    %c0_45 = arith.constant 0 : index
    %c2_46 = arith.constant 2 : index
    %c0_47 = arith.constant 0 : index
    %c0_48 = arith.constant 0 : index
    %110 = vector.load %arg6[%c0_44, %c0_45, %c2_46, %c0_47, %c0_48] : memref<1x1x5x8x128xf32, #tpu.memory_space<vmem>>, vector<1x1x1x8x128xf32>
    %111 = vector.shape_cast %110 : vector<1x1x1x8x128xf32> to vector<8x128xf32>
    %112 = vector.shape_cast %109 : vector<8x128xf32> to vector<1x1x1x8x128xf32>
    tpu.vector_store %arg6[%c0_44, %c0_45, %c2_46, %c0_47, %c0_48], %112 {strides = array<i32>} : memref<1x1x5x8x128xf32, #tpu.memory_space<vmem>>, vector<1x1x1x8x128xf32>,
    %c0_49 = arith.constant 0 : index
    %c0_50 = arith.constant 0 : index
    %c3_51 = arith.constant 3 : index
    %c0_52 = arith.constant 0 : index
    %c0_53 = arith.constant 0 : index
    %113 = vector.load %arg6[%c0_49, %c0_50, %c3_51, %c0_52, %c0_53] : memref<1x1x5x8x128xf32, #tpu.memory_space<vmem>>, vector<1x1x1x8x128xf32>
    %114 = vector.shape_cast %113 : vector<1x1x1x8x128xf32> to vector<8x128xf32>
    %115 = arith.addf %114, %92 : vector<8x128xf32>
    %c0_54 = arith.constant 0 : index
    %c0_55 = arith.constant 0 : index
    %c3_56 = arith.constant 3 : index
    %c0_57 = arith.constant 0 : index
    %c0_58 = arith.constant 0 : index
    %116 = vector.load %arg6[%c0_54, %c0_55, %c3_56, %c0_57, %c0_58] : memref<1x1x5x8x128xf32, #tpu.memory_space<vmem>>, vector<1x1x1x8x128xf32>
    %117 = vector.shape_cast %116 : vector<1x1x1x8x128xf32> to vector<8x128xf32>
    %118 = vector.shape_cast %115 : vector<8x128xf32> to vector<1x1x1x8x128xf32>
    tpu.vector_store %arg6[%c0_54, %c0_55, %c3_56, %c0_57, %c0_58], %118 {strides = array<i32>} : memref<1x1x5x8x128xf32, #tpu.memory_space<vmem>>, vector<1x1x1x8x128xf32>,
    %c0_59 = arith.constant 0 : index
    %c0_60 = arith.constant 0 : index
    %c4 = arith.constant 4 : index
    %c0_61 = arith.constant 0 : index
    %c0_62 = arith.constant 0 : index
    %119 = vector.load %arg6[%c0_59, %c0_60, %c4, %c0_61, %c0_62] : memref<1x1x5x8x128xf32, #tpu.memory_space<vmem>>, vector<1x1x1x8x128xf32>
    %120 = vector.shape_cast %119 : vector<1x1x1x8x128xf32> to vector<8x128xf32>
    %121 = arith.addf %120, %94 : vector<8x128xf32>
    %c0_63 = arith.constant 0 : index
    %c0_64 = arith.constant 0 : index
    %c4_65 = arith.constant 4 : index
    %c0_66 = arith.constant 0 : index
    %c0_67 = arith.constant 0 : index
    %122 = vector.load %arg6[%c0_63, %c0_64, %c4_65, %c0_66, %c0_67] : memref<1x1x5x8x128xf32, #tpu.memory_space<vmem>>, vector<1x1x1x8x128xf32>
    %123 = vector.shape_cast %122 : vector<1x1x1x8x128xf32> to vector<8x128xf32>
    %124 = vector.shape_cast %121 : vector<8x128xf32> to vector<1x1x1x8x128xf32>
    tpu.vector_store %arg6[%c0_63, %c0_64, %c4_65, %c0_66, %c0_67], %124 {strides = array<i32>} : memref<1x1x5x8x128xf32, #tpu.memory_space<vmem>>, vector<1x1x1x8x128xf32>,
    return
  }
  func.func @transform_0(%arg0: i32, %arg1: i32, %arg2: i32) -> i32 {
    %c0_i32 = arith.constant 0 : i32
    %c0_i32_0 = arith.constant 0 : i32
    return %c0_i32 : i32
  }
  func.func @transform_1(%arg0: i32, %arg1: i32, %arg2: i32) -> (i32, i32, i32, i32) {
    %c2_i32 = arith.constant 2 : i32
    %0 = arith.muli %arg1, %c2_i32 : i32
    %1 = arith.addi %0, %arg2 : i32
    %c3_i32 = arith.constant 3 : i32
    %2 = arith.minsi %1, %c3_i32 : i32
    %c0_i32 = arith.constant 0 : i32
    %c0_i32_0 = arith.constant 0 : i32
    %c0_i32_1 = arith.constant 0 : i32
    return %arg0, %c0_i32, %2, %c0_i32_0 : i32, i32, i32, i32
  }
  func.func @transform_2(%arg0: i32, %arg1: i32, %arg2: i32) -> (i32, i32, i32) {
    %c2_i32 = arith.constant 2 : i32
    %0 = arith.muli %arg1, %c2_i32 : i32
    %1 = arith.addi %0, %arg2 : i32
    %c3_i32 = arith.constant 3 : i32
    %2 = arith.minsi %1, %c3_i32 : i32
    %c0_i32 = arith.constant 0 : i32
    %c0_i32_0 = arith.constant 0 : i32
    return %arg0, %2, %c0_i32 : i32, i32, i32
  }
  func.func @transform_3(%arg0: i32, %arg1: i32, %arg2: i32) -> (i32, i32, i32, i32, i32) {
    %c0_i32 = arith.constant 0 : i32
    %c0_i32_0 = arith.constant 0 : i32
    %c0_i32_1 = arith.constant 0 : i32
    %c0_i32_2 = arith.constant 0 : i32
    return %arg0, %arg1, %c0_i32, %c0_i32_0, %c0_i32_1 : i32, i32, i32, i32, i32
  }
}

</mosaic_0001>

<llo_original>
// kernel: dice_ce_loss.1
$region0: #{dice_ce_loss.1}
  #allocation0 [shape = 'u32[]', space=smem, size = 0x4, offset = 0x4, fixed_abs, tag = 'smem constant byte address 0x4 - core index']
  #allocation1 [shape = 'u32[144,128]{1,0:T(1,128)}', space=vmem, size = 0x12000, scoped, tag = 'internal scratch']
  %s0 = inlined_call_operand.vmem [shape: f32[4], index: 0, kind: input, shape index: {}]
  %s1 = inlined_call_operand.vmem [shape: f32[2,4,32,128], index: 1, kind: input, shape index: {}]
  %s2 = inlined_call_operand.vmem [shape: s32[2,32,128], index: 2, kind: input, shape index: {}]
  %s3 = inlined_call_operand.vmem [shape: f32[2,2,5,8,128], index: 3, kind: output, shape index: {}]
  %s4 = sld [smem:[#allocation0]]
  $region91: #{dice_ce_loss.1} parent=0
    _
  %s6 = ssub.s32 1, %s4
  %s7 = scalar_select 0, %s6, %s4
  $region1: #{dice_ce_loss.1} parent=0
    #allocation2 [shape = 'u8[512]{0}', space=smem, size = 0x200, scoped, tag = 'input window, operand 0, single buffered']
    #allocation3 [shape = 's32[2]{0}', space=sflag, size = 0x8, scoped, tag = 'scoped memory for dice_ce_loss.1']
    #allocation4 [shape = 'u8[32768]{0}', space=vmem, size = 0x8000, scoped, tag = 'input window, operand 1']
    %8 = vsyncpa [#allocation3], 0
    loop: start=0, step=1, limit=10
    $region2: #{dice_ce_loss.1} parent=1 // loop_pre_header
      _
    $region3: #{dice_ce_loss.1} parent=1 // loop_header
      %s10 = sphi 0, %s14
      %p11 = scmp.ge.s32.totalorder %s10, 10
      %s17 = sphi 0, %s36
      %s18 = sphi 0, %s32
      %s19 = sphi 0, %s28
      %s20 = sphi 0, %s17
      %s21 = sphi 0, %s18
      %s22 = sphi 0, %s19
      %s23 = sphi 0, %s20
      %s24 = sphi 0, %s21
      %s25 = sphi 0, %s22
      %s37 = sphi 0, %s37
      %s39 = sphi 0, %s37
      %s40 = sphi 0, %s39
      %s54 = sphi 0, %s40
      %s70 = sphi 0, %s72
      %s73 = sphi 0, %s70
      %s74 = sphi 0, %s73
      %s90 = sphi 0, %s74
      %s106 = sphi 0, %s108
      %s109 = sphi 0, %s106
      %s110 = sphi 0, %s109
      %s126 = sphi 0, %s110
      %s134 = sphi 0, %s136
      %s137 = sphi 0, %s134
      %s138 = sphi 0, %s137
      %s154 = sphi 0, %s138
    $region4: #{dice_ce_loss.1} parent=1 // loop_header_branch
      %13 = sbr.rel (%p11) target = $region8
    $region5: #{dice_ce_loss.1} parent=1 // loop_body
      %s15 = ssub.s32 %s10, 1
      %s16 = ssub.s32 %s10, 2
      %s26 = sadd.s32 1, %s19
      %p27 = scmp.ge.s32.totalorder %s26, 2
      %s28 = scalar_select %p27, 0, %s26
      %s29 = sadd.s32 1, %s18
      %s30 = scalar_select %p27, %s29, %s18
      %p31 = scmp.ge.s32.totalorder %s30, 2
      %s32 = scalar_select %p31, 0, %s30
      %s33 = sadd.s32 1, %s17
      %s34 = scalar_select %p31, %s33, %s17
      %p35 = scmp.ge.s32.totalorder %s34, 2
      %s36 = scalar_select %p35, 0, %s34
      %s38 = sadd.s32 %s37, 1
      %p41 = scmp.eq.s32.totalorder %s10, 7
      %p42 = scmp.ne.s32.totalorder %s37, %s39
      %p43 = scmp.eq.s32.totalorder %s10, 0
      %p44 = por %p42, %p43
      %p45 = scmp.ne.s32.totalorder %s37, %s39
      %p46 = scmp.eq.s32.totalorder %s15, 7
      %p47 = por %p45, %p46
      %p48 = scmp.ne.s32.totalorder %s39, %s40
      %p49 = scmp.eq.s32.totalorder %s15, 0
      %p50 = por %p48, %p49
      %p51 = scmp.ne.s32.totalorder %s39, %s40
      %p52 = scmp.eq.s32.totalorder %s16, 7
      %p53 = por %p51, %p52
      %p55 = scmp.ne.s32.totalorder %s40, %s54
      %p56 = scmp.eq.s32.totalorder %s16, 0
      %p57 = por %p55, %p56
      %s58 = smul.u32 %s18, 2
      %s59 = sadd.s32 %s58, %s19
      %p60 = scmp.lt.s32.totalorder %s59, 3
      %s61 = scalar_select %p60, %s59, 3
      %s62 = smul.u32 %s32, 2
      %s63 = sadd.s32 %s62, %s28
      %p64 = scmp.lt.s32.totalorder %s63, 3
      %s65 = scalar_select %p64, %s63, 3
      %s66 = ssub.s32 %s17, %s36
      %s67 = ssub.s32 %s61, %s65
      %s68 = sor.u32 %s66, %s67
      %p69 = scmp.eq.s32.totalorder %s68, 0
      %s71 = sadd.s32 %s70, 1
      %s72 = scalar_select %p69, %s70, %s71
      %p75 = pneg %p69
      %p76 = scmp.eq.s32.totalorder %s10, 7
      %p77 = por %p75, %p76
      %p78 = scmp.ne.s32.totalorder %s70, %s73
      %p79 = scmp.eq.s32.totalorder %s10, 0
      %p80 = por %p78, %p79
      %p81 = scmp.ne.s32.totalorder %s70, %s73
      %p82 = scmp.eq.s32.totalorder %s15, 7
      %p83 = por %p81, %p82
      %p84 = scmp.ne.s32.totalorder %s73, %s74
      %p85 = scmp.eq.s32.totalorder %s15, 0
      %p86 = por %p84, %p85
      %p87 = scmp.ne.s32.totalorder %s73, %s74
      %p88 = scmp.eq.s32.totalorder %s16, 7
      %p89 = por %p87, %p88
      %p91 = scmp.ne.s32.totalorder %s74, %s90
      %p92 = scmp.eq.s32.totalorder %s16, 0
      %p93 = por %p91, %p92
      %s94 = smul.u32 %s18, 2
      %s95 = sadd.s32 %s94, %s19
      %p96 = scmp.lt.s32.totalorder %s95, 3
      %s97 = scalar_select %p96, %s95, 3
      %s98 = smul.u32 %s32, 2
      %s99 = sadd.s32 %s98, %s28
      %p100 = scmp.lt.s32.totalorder %s99, 3
      %s101 = scalar_select %p100, %s99, 3
      %s102 = ssub.s32 %s17, %s36
      %s103 = ssub.s32 %s97, %s101
      %s104 = sor.u32 %s102, %s103
      %p105 = scmp.eq.s32.totalorder %s104, 0
      %s107 = sadd.s32 %s106, 1
      %s108 = scalar_select %p105, %s106, %s107
      %p111 = pneg %p105
      %p112 = scmp.eq.s32.totalorder %s10, 7
      %p113 = por %p111, %p112
      %p114 = scmp.ne.s32.totalorder %s106, %s109
      %p115 = scmp.eq.s32.totalorder %s10, 0
      %p116 = por %p114, %p115
      %p117 = scmp.ne.s32.totalorder %s106, %s109
      %p118 = scmp.eq.s32.totalorder %s15, 7
      %p119 = por %p117, %p118
      %p120 = scmp.ne.s32.totalorder %s109, %s110
      %p121 = scmp.eq.s32.totalorder %s15, 0
      %p122 = por %p120, %p121
      %p123 = scmp.ne.s32.totalorder %s109, %s110
      %p124 = scmp.eq.s32.totalorder %s16, 7
      %p125 = por %p123, %p124
      %p127 = scmp.ne.s32.totalorder %s110, %s126
      %p128 = scmp.eq.s32.totalorder %s16, 0
      %p129 = por %p127, %p128
      %s130 = ssub.s32 %s17, %s36
      %s131 = ssub.s32 %s18, %s32
      %s132 = sor.u32 %s130, %s131
      %p133 = scmp.eq.s32.totalorder %s132, 0
      %s135 = sadd.s32 %s134, 1
      %s136 = scalar_select %p133, %s134, %s135
      %p139 = pneg %p133
      %p140 = scmp.eq.s32.totalorder %s10, 7
      %p141 = por %p139, %p140
      %p142 = scmp.ne.s32.totalorder %s134, %s137
      %p143 = scmp.eq.s32.totalorder %s10, 0
      %p144 = por %p142, %p143
      %p145 = scmp.ne.s32.totalorder %s134, %s137
      %p146 = scmp.eq.s32.totalorder %s15, 7
      %p147 = por %p145, %p146
      %p148 = scmp.ne.s32.totalorder %s137, %s138
      %p149 = scmp.eq.s32.totalorder %s15, 0
      %p150 = por %p148, %p149
      %p151 = scmp.ne.s32.totalorder %s137, %s138
      %p152 = scmp.eq.s32.totalorder %s16, 7
      %p153 = por %p151, %p152
      %p155 = scmp.ne.s32.totalorder %s138, %s154
      %p156 = scmp.eq.s32.totalorder %s16, 0
      %p157 = por %p155, %p156
      %p158 = scmp.le.s32.totalorder 1, %s10
      %p159 = scmp.lt.s32.totalorder %s10, 9
      %p160 = pnand %p158, %p159
      %p161 = pneg %p160
      // Predicated region
      $region9: #{dice_ce_loss.1} parent=5 // pred_check
        _
      $region10: #{dice_ce_loss.1} parent=5 // pred_check_branch
        %163 = sbr.rel (%p160) target = $region12
      $region11: #{dice_ce_loss.1} parent=5 // pred_region
        %s164 = ssub.s32 %s10, 1
        // Predicated region
        $region13: #{dice_ce_loss.1} parent=11 // pred_check
          %p165 = pneg %p50
        $region14: #{dice_ce_loss.1} parent=11 // pred_check_branch
          %167 = sbr.rel (%p165) target = $region16
        $region15: #{dice_ce_loss.1} parent=11 // pred_region
          %s169 = ssub.s32 16, 16
          %170 = vsyncadd [#allocation3], %s169
          %s172 = sshll.u32 %s0, 4
          %s173 = int_to_ptr.vmem [resolvable:$true] %s172
          %175 = dma.vmem_to_smem %s173, 16, [#allocation2], [#allocation3]
        $region16: #{dice_ce_loss.1} parent=11 // pred_fallthru
          _
      $region12: #{dice_ce_loss.1} parent=5 // pred_fallthru
        _
      %p176 = scmp.lt.s32.totalorder %s10, 8
      // Predicated region
      $region17: #{dice_ce_loss.1} parent=5 // pred_check
        %p177 = pneg %p176
      $region18: #{dice_ce_loss.1} parent=5 // pred_check_branch
        %179 = sbr.rel (%p177) target = $region20
      $region19: #{dice_ce_loss.1} parent=5 // pred_region
        // Predicated region
        $region21: #{dice_ce_loss.1} parent=19 // pred_check
          %p180 = pneg %p80
        $region22: #{dice_ce_loss.1} parent=19 // pred_check_branch
          %182 = sbr.rel (%p180) target = $region24
        $region23: #{dice_ce_loss.1} parent=19 // pred_region
          %s183 = sand.u32 %s70, 1
          %s184 = sand.u32 %s70, 1
          %s185 = smul.addr %s184, 32
          %s186 = scalar_lea.vmem [#allocation4], %s185
          %s187 = smul.u32 %s18, 2
          %s188 = sadd.s32 %s187, %s19
          %p189 = scmp.lt.s32.totalorder %s188, 3
          %s190 = scalar_select %p189, %s188, 3
          %s191 = smul.addr %s17, 16
          %s192 = sadd.s32 %s190, %s191
          %s193 = smul.addr %s192, 8
          %s194 = scalar_lea.vmem %s1, %s193
          // Predicated region
          $region25: #{dice_ce_loss.1} parent=23 // pred_check
            _
          $region26: #{dice_ce_loss.1} parent=23 // pred_check_branch
            %196 = sbr.rel (0) target = $region28
          $region27: #{dice_ce_loss.1} parent=23 // pred_region
            // Predicated region
            $region29: #{dice_ce_loss.1} parent=27 // pred_check
              _
            $region30: #{dice_ce_loss.1} parent=27 // pred_check_branch
              %198 = sbr.rel (0) target = $region32
            $region31: #{dice_ce_loss.1} parent=27 // pred_region
              // Predicated region
              $region44: #{dice_ce_loss.1} parent=31 // pred_check
                _
              $region45: #{dice_ce_loss.1} parent=31 // pred_check_branch
                %219 = sbr.rel (0) target = $region47
              $region46: #{dice_ce_loss.1} parent=31 // pred_region
                loop: start=0, step=1, limit=1
                $region48: #{dice_ce_loss.1} parent=46 // loop_pre_header
                  _
                $region49: #{dice_ce_loss.1} parent=46 // loop_header
                  %s221 = sphi 0, %s225
                  %p222 = scmp.ge.s32.totalorder %s221, 1
                  %s226 = sphi %s194, %s194
                  %s227 = sphi %s186, %s186
                $region50: #{dice_ce_loss.1} parent=46 // loop_header_branch
                  %224 = sbr.rel (%p222) target = $region54
                $region51: #{dice_ce_loss.1} parent=46 // loop_body
                  %v228 = vld [vmem:[%s226] sm:$0xff]
                  %229 = vst [vmem:[%s227] sm:$0xff] %v228
                  %v230 = vld [vmem:[%s226 + $0x20] sm:$0xff]
                  %231 = vst [vmem:[%s227 + $0x8] sm:$0xff] %v230
                  %v232 = vld [vmem:[%s226 + $0x40] sm:$0xff]
                  %233 = vst [vmem:[%s227 + $0x10] sm:$0xff] %v232
                  %v234 = vld [vmem:[%s226 + $0x60] sm:$0xff]
                  %235 = vst [vmem:[%s227 + $0x18] sm:$0xff] %v234
                $region52: #{dice_ce_loss.1} parent=46 // loop_footer
                  %s225 = sadd.s32 1, %s221
                $region53: #{dice_ce_loss.1} parent=46 // loop_footer_branch
                  %220 = sbr.rel target = $region49
                $region54: #{dice_ce_loss.1} parent=46 // loop_exit
                  _
              $region47: #{dice_ce_loss.1} parent=31 // pred_fallthru
                _
              // Predicated region
              $region55: #{dice_ce_loss.1} parent=31 // pred_check
                _
              $region56: #{dice_ce_loss.1} parent=31 // pred_check_branch
                %237 = sbr.rel target = $region58
              $region57: #{dice_ce_loss.1} parent=31 // pred_region
                _
              $region58: #{dice_ce_loss.1} parent=31 // pred_fallthru
                _
            $region32: #{dice_ce_loss.1} parent=27 // pred_fallthru
              _
            // Predicated region
            $region33: #{dice_ce_loss.1} parent=27 // pred_check
              _
            $region34: #{dice_ce_loss.1} parent=27 // pred_check_branch
              %200 = sbr.rel target = $region36
            $region35: #{dice_ce_loss.1} parent=27 // pred_region
              loop: start=0, step=1, limit=1
              $region37: #{dice_ce_loss.1} parent=35 // loop_pre_header
                _
              $region38: #{dice_ce_loss.1} parent=35 // loop_header
                %s203 = sphi 0, %s207
                %p204 = scmp.ge.s32.totalorder %s203, 1
                %s208 = sphi %s194, %s194
                %s209 = sphi %s186, %s186
              $region39: #{dice_ce_loss.1} parent=35 // loop_header_branch
                %206 = sbr.rel (%p204) target = $region43
              $region40: #{dice_ce_loss.1} parent=35 // loop_body
                %v210 = vld [vmem:[%s208] sm:$0xff]
                %211 = vst [vmem:[%s209] sm:$0xff] %v210
                %v212 = vld [vmem:[%s208 + $0x20] sm:$0xff]
                %213 = vst [vmem:[%s209 + $0x8] sm:$0xff] %v212
                %v214 = vld [vmem:[%s208 + $0x40] sm:$0xff]
                %215 = vst [vmem:[%s209 + $0x10] sm:$0xff] %v214
                %v216 = vld [vmem:[%s208 + $0x60] sm:$0xff]
                %217 = vst [vmem:[%s209 + $0x18] sm:$0xff] %v216
              $region41: #{dice_ce_loss.1} parent=35 // loop_footer
                %s207 = sadd.s32 1, %s203
              $region42: #{dice_ce_loss.1} parent=35 // loop_footer_branch
                %202 = sbr.rel target = $region38
              $region43: #{dice_ce_loss.1} parent=35 // loop_exit
                _
            $region36: #{dice_ce_loss.1} parent=27 // pred_fallthru
              _
          $region28: #{dice_ce_loss.1} parent=23 // pred_fallthru
            _
          %238 = vnop
        $region24: #{dice_ce_loss.1} parent=19 // pred_fallthru
          _
        // Predicated region
        $region59: #{dice_ce_loss.1} parent=19 // pred_check
          %p239 = pneg %p116
        $region60: #{dice_ce_loss.1} parent=19 // pred_check_branch
          %241 = sbr.rel (%p239) target = $region62
        $region61: #{dice_ce_loss.1} parent=19 // pred_region
          %s242 = smul.u32 %s18, 2
          %s243 = sadd.s32 %s242, %s19
          %p244 = scmp.lt.s32.totalorder %s243, 3
          %s245 = scalar_select %p244, %s243, 3
          %p246 = scmp.lt.s32.totalorder %s17, 1
          %s247 = scalar_select %p246, %s17, 1
          %p248 = scmp.lt.s32.totalorder %s245, 3
          %s249 = scalar_select %p248, %s245, 3
          %s250 = smul.addr %s247, 4
          %s251 = sadd.s32 %s249, %s250
          %s252 = smul.addr %s251, 8
          %s253 = scalar_lea.vmem %s2, %s252
          %s254 = smul.u32 %s18, 2
          %s255 = sadd.s32 %s254, %s19
          %p256 = scmp.lt.s32.totalorder %s255, 3
          %s257 = scalar_select %p256, %s255, 3
        $region62: #{dice_ce_loss.1} parent=19 // pred_fallthru
          _
      $region20: #{dice_ce_loss.1} parent=5 // pred_fallthru
        _
      %p258 = scmp.le.s32.totalorder 1, %s10
      %p259 = scmp.lt.s32.totalorder %s10, 9
      %p260 = pnand %p258, %p259
      %p261 = pneg %p260
      // Predicated region
      $region63: #{dice_ce_loss.1} parent=5 // pred_check
        _
      $region64: #{dice_ce_loss.1} parent=5 // pred_check_branch
        %263 = sbr.rel (%p260) target = $region66
      $region65: #{dice_ce_loss.1} parent=5 // pred_region
        %s264 = ssub.s32 %s10, 1
        // Predicated region
        $region67: #{dice_ce_loss.1} parent=65 // pred_check
          %p265 = pneg %p50
        $region68: #{dice_ce_loss.1} parent=65 // pred_check_branch
          %267 = sbr.rel (%p265) target = $region70
        $region69: #{dice_ce_loss.1} parent=65 // pred_region
          %268 = dma.done [#allocation3], 16
        $region70: #{dice_ce_loss.1} parent=65 // pred_fallthru
          _
        %s269 = sand.u32 %s73, 1
        %s270 = sand.u32 %s73, 1
        %s271 = smul.addr %s270, 32
        %s272 = scalar_lea.vmem [#allocation4], %s271
        // Predicated region
        $region71: #{dice_ce_loss.1} parent=65 // pred_check
          %p273 = pneg %p86
        $region72: #{dice_ce_loss.1} parent=65 // pred_check_branch
          %275 = sbr.rel (%p273) target = $region74
        $region73: #{dice_ce_loss.1} parent=65 // pred_region
          _
        $region74: #{dice_ce_loss.1} parent=65 // pred_fallthru
          _
        %276 = sfence
        %p277 = pneg %p50
        %p278 = pneg %p47
        %s279 = sand.u32 %s73, 1
        %s280 = sand.u32 %s73, 1
        %s281 = smul.addr %s280, 32
        %s282 = scalar_lea.vmem [#allocation4], %s281
        %p283 = pneg %p86
        %p284 = pneg %p83
        %s285 = smul.u32 %s21, 2
        %s286 = sadd.s32 %s285, %s22
        %p287 = scmp.lt.s32.totalorder %s286, 3
        %s288 = scalar_select %p287, %s286, 3
        %p289 = scmp.lt.s32.totalorder %s20, 1
        %s290 = scalar_select %p289, %s20, 1
        %p291 = scmp.lt.s32.totalorder %s288, 3
        %s292 = scalar_select %p291, %s288, 3
        %s293 = smul.addr %s290, 4
        %s294 = sadd.s32 %s292, %s293
        %s295 = smul.addr %s294, 8
        %s296 = scalar_lea.vmem %s2, %s295
        %p297 = pneg %p122
        %p298 = pneg %p119
        %p299 = pneg %p150
        %p300 = pneg %p147
        %p301 = scmp.lt.s32.totalorder %s20, 1
        %s302 = scalar_select %p301, %s20, 1
        %p303 = scmp.lt.s32.totalorder %s21, 1
        %s304 = scalar_select %p303, %s21, 1
        %s305 = smul.addr %s304, 5
        %s306 = smul.addr %s302, 10
        %s307 = sadd.s32 %s305, %s306
        %s308 = smul.addr %s307, 8
        %s309 = scalar_lea.vmem %s3, %s308
        %s310 = smul.u32 %s21, 2
        %s311 = sadd.s32 %s310, %s22
        %p312 = scmp.lt.s32.totalorder %s311, 3
        %s313 = scalar_select %p312, %s311, 3
        %s314 = smul.u32 %s21, 2
        %s315 = sadd.s32 %s314, %s22
        %p316 = scmp.lt.s32.totalorder %s315, 3
        %s317 = scalar_select %p316, %s315, 3
        %p318 = scmp.lt.s32.totalorder %s20, 1
        %s319 = scalar_select %p318, %s20, 1
        %p320 = scmp.lt.s32.totalorder %s317, 3
        %s321 = scalar_select %p320, %s317, 3
        %s322 = smul.addr %s319, 4
        %s323 = sadd.s32 %s321, %s322
        %s324 = smul.addr %s323, 8
        %s325 = scalar_lea.vmem %s2, %s324
        %s326 = smul.u32 %s21, 2
        %s327 = sadd.s32 %s326, %s22
        %p328 = scmp.lt.s32.totalorder %s327, 3
        %s329 = scalar_select %p328, %s327, 3
        %p330 = scmp.lt.s32.totalorder %s20, 1
        %s331 = scalar_select %p330, %s20, 1
        %p332 = scmp.lt.s32.totalorder %s21, 1
        %s333 = scalar_select %p332, %s21, 1
        %s334 = smul.addr %s333, 5
        %s335 = smul.addr %s331, 10
        %s336 = sadd.s32 %s334, %s335
        %s337 = smul.addr %s336, 8
        %s338 = scalar_lea.vmem %s3, %s337
        %p339 = scmp.eq.s32.totalorder %s22, 0
        // Predicated region
        $region75: #{dice_ce_loss.1} parent=65 // pred_check
          %p340 = pneg %p339
        $region76: #{dice_ce_loss.1} parent=65 // pred_check_branch
          %342 = sbr.rel (%p340) target = $region78
        $region77: #{dice_ce_loss.1} parent=65 // pred_region
          %343 = vst [vmem:[%s338] sm:$0xff] 0.0
          %344 = vst [vmem:[%s338 + $0x8] sm:$0xff] 0.0
          %345 = vst [vmem:[%s338 + $0x10] sm:$0xff] 0.0
          %346 = vst [vmem:[%s338 + $0x18] sm:$0xff] 0.0
          %347 = vst [vmem:[%s338 + $0x20] sm:$0xff] 0.0
        $region78: #{dice_ce_loss.1} parent=65 // pred_fallthru
          _
        %v348 = vld [vmem:[%s272] sm:$0xff]
        %v349 = vld [vmem:[%s272 + $0x8] sm:$0xff]
        %v350 = vld [vmem:[%s272 + $0x10] sm:$0xff]
        %v351 = vld [vmem:[%s272 + $0x18] sm:$0xff]
        %v352 = vld [vmem:[%s325] sm:$0xff]
        %s353 = smul.u32 %s21, 2
        %s354 = sadd.s32 %s353, %s22
        %v355 = vlaneseq
        %v356 = vshrl.u32 %v355, 7
        %v357 = vlaneseq
        %v358 = vand.u32 %v357, 127
        %s359 = smul.u32 %s354, 8
        %v360 = vstv %s359
        %v361 = vadd.s32 %v360, %v356
        %v362 = vmul.u32 %v361, 128
        %v363 = vadd.s32 %v362, %v358
        %vm364 = vcmp.lt.s32.totalorder %v363, 4096
        %v365 = vmax.f32 %v348, %v349
        %v366 = vmax.f32 %v350, %v351
        %v367 = vmax.f32 %v365, %v366
        %v368 = vsub.f32 %v348, %v367
        %v369 = vsub.f32 %v349, %v367
        %v370 = vsub.f32 %v350, %v367
        %v371 = vsub.f32 %v351, %v367
        %v372 = vmul.f32 %v368, 1.442695
        %v373 = vpow.pop %v372
        %v374 = vmul.f32 %v369, 1.442695
        %v375 = vpow.pop %v374
        %v376 = vmul.f32 %v370, 1.442695
        %v377 = vpow.pop %v376
        %v378 = vmul.f32 %v371, 1.442695
        %v379 = vpow.pop %v378
        %v380 = vadd.f32 %v375, %v377
        %v381 = vadd.f32 %v380, %v379
        %v382 = vadd.f32 %v381, %v373
        %v383 = vrcp.pop %v382
        %v384 = vlog2.pop %v382
        %v385 = vmul.f32 %v384, 0.6931472
        %v386 = vadd.f32 %v367, %v385
        %vm387 = vcmp.eq.s32.totalorder %v352, 0
        %v388 = vsel %vm387, %v348, 0.0
        %v389 = vsel %vm387, %v373, 0.0
        %s390 = sld [smem:[#allocation2]]
        %v391 = vstv %s390
        %v392 = vsel %vm387, %v391, 0.0
        %vm393 = vcmp.eq.s32.totalorder %v352, 1
        %v394 = vsel %vm393, %v349, %v388
        %v395 = vsel %vm393, %v375, %v389
        %s396 = sld [smem:[#allocation2 + $0x1]]
        %v397 = vstv %s396
        %v398 = vsel %vm393, %v397, %v392
        %vm399 = vcmp.eq.s32.totalorder %v352, 2
        %v400 = vsel %vm399, %v350, %v394
        %v401 = vsel %vm399, %v377, %v395
        %s402 = sld [smem:[#allocation2 + $0x2]]
        %v403 = vstv %s402
        %v404 = vsel %vm399, %v403, %v398
        %vm405 = vcmp.eq.s32.totalorder %v352, 3
        %v406 = vsel %vm405, %v351, %v400
        %v407 = vsel %vm405, %v379, %v401
        %s408 = sld [smem:[#allocation2 + $0x3]]
        %v409 = vstv %s408
        %v410 = vsel %vm405, %v409, %v404
        %v411 = vsub.f32 %v386, %v406
        %vm412 = vcmp.ge.s32.totalorder %v352, 1
        %vm413 = vmand %vm364, %vm412
        %v414 = vmul.f32 %v407, %v383
        %v415 = vsel %vm413, %v414, 0.0
        %v416 = vmul.f32 %v381, %v383
        %v417 = vsel %vm364, %v416, 0.0
        %v418 = vsel %vm413, 1.0, 0.0
        %v419 = vmul.f32 %v410, %v411
        %v420 = vsel %vm364, %v419, 0.0
        %v421 = vsel %vm364, %v410, 0.0
        %v422 = vld [vmem:[%s338] sm:$0xff]
        %v423 = vadd.f32 %v422, %v415
        %424 = vst [vmem:[%s338] sm:$0xff] %v423
        %s425 = scalar_lea.vmem %s338, 8
        %v426 = vld [vmem:[%s425] sm:$0xff]
        %v427 = vadd.f32 %v426, %v417
        %428 = vst [vmem:[%s425] sm:$0xff] %v427
        %s429 = scalar_lea.vmem %s338, 16
        %v430 = vld [vmem:[%s429] sm:$0xff]
        %v431 = vadd.f32 %v430, %v418
        %432 = vst [vmem:[%s429] sm:$0xff] %v431
        %s433 = scalar_lea.vmem %s338, 24
        %v434 = vld [vmem:[%s433] sm:$0xff]
        %v435 = vadd.f32 %v434, %v420
        %436 = vst [vmem:[%s433] sm:$0xff] %v435
        %s437 = scalar_lea.vmem %s338, 32
        %v438 = vld [vmem:[%s437] sm:$0xff]
        %v439 = vadd.f32 %v438, %v421
        %440 = vst [vmem:[%s437] sm:$0xff] %v439
        %p441 = scmp.lt.s32.totalorder %s20, 1
        %s442 = scalar_select %p441, %s20, 1
        %p443 = scmp.lt.s32.totalorder %s21, 1
        %s444 = scalar_select %p443, %s21, 1
        %s445 = smul.addr %s444, 5
        %s446 = smul.addr %s442, 10
        %s447 = sadd.s32 %s445, %s446
        %s448 = smul.addr %s447, 8
        %s449 = scalar_lea.vmem %s3, %s448
        // Predicated region
        $region79: #{dice_ce_loss.1} parent=65 // pred_check
          %p450 = pneg %p147
        $region80: #{dice_ce_loss.1} parent=65 // pred_check_branch
          %452 = sbr.rel (%p450) target = $region82
        $region81: #{dice_ce_loss.1} parent=65 // pred_region
          _
        $region82: #{dice_ce_loss.1} parent=65 // pred_fallthru
          _
      $region66: #{dice_ce_loss.1} parent=5 // pred_fallthru
        _
      %p453 = scmp.le.s32.totalorder 2, %s10
      // Predicated region
      $region83: #{dice_ce_loss.1} parent=5 // pred_check
        %p454 = pneg %p453
      $region84: #{dice_ce_loss.1} parent=5 // pred_check_branch
        %456 = sbr.rel (%p454) target = $region86
      $region85: #{dice_ce_loss.1} parent=5 // pred_region
        %s457 = ssub.s32 %s10, 2
        // Predicated region
        $region87: #{dice_ce_loss.1} parent=85 // pred_check
          %p458 = pneg %p153
        $region88: #{dice_ce_loss.1} parent=85 // pred_check_branch
          %460 = sbr.rel (%p458) target = $region90
        $region89: #{dice_ce_loss.1} parent=85 // pred_region
          %p461 = scmp.lt.s32.totalorder %s23, 1
          %s462 = scalar_select %p461, %s23, 1
          %p463 = scmp.lt.s32.totalorder %s24, 1
          %s464 = scalar_select %p463, %s24, 1
          %s465 = smul.addr %s464, 5
          %s466 = smul.addr %s462, 10
          %s467 = sadd.s32 %s465, %s466
          %s468 = smul.addr %s467, 8
          %s469 = scalar_lea.vmem %s3, %s468
        $region90: #{dice_ce_loss.1} parent=85 // pred_fallthru
          _
      $region86: #{dice_ce_loss.1} parent=5 // pred_fallthru
        _
    $region6: #{dice_ce_loss.1} parent=1 // loop_footer
      %s14 = sadd.s32 1, %s10
    $region7: #{dice_ce_loss.1} parent=1 // loop_footer_branch
      %9 = sbr.rel target = $region3
    $region8: #{dice_ce_loss.1} parent=1 // loop_exit
      _
    %470 = vsyncpa [#allocation3], 1
    %s471 = scalar_lea.sflag [#allocation3], 1
    %472 = vsyncpa %s471, 1

</llo_original>
